<compile_context>
chip_gen: v5e
topology: v5e:2x2
jax: 0.10.0
libtpu: 0.0.40
codegen_flags: <defaults>
</compile_context>

<pallas_src>
import jax
import jax.numpy as jnp
from jax.experimental import pallas as pl
from jax.experimental.pallas import tpu as pltpu


def _make_kernel(N, S_total, n_s, use_cache, neg_slope=0.2, eps=1e-5):
    inv_count = 1.0 / float(N * S_total)   # BN stats over N*S elements/channel
    inv_S = 1.0 / float(S_total)           # AdaptiveAvgPool3d(1) divisor

    def kernel(vol_ref, wT_ref, gamma_ref, beta_ref, pt_ref, out_ref, *scratch):
        if use_cache:
            (sum_ref, sumsq_ref, wsc_ref, shift_ref, pooled_ref,
             xcache_ref) = scratch
        else:
            sum_ref, sumsq_ref, wsc_ref, shift_ref, pooled_ref = scratch
            xcache_ref = None

        p = pl.program_id(0)                 # 0 = stats pass, 1 = norm+pool pass
        n = pl.program_id(1)                 # sample index
        s = pl.program_id(2)                 # S tile index
        last_n = pl.num_programs(1) - 1
        last_s = pl.num_programs(2) - 1
        idx = n * n_s + s                    # flat tile index into the VMEM cache

        @pl.when(p == 0)
        def _pass_stats():
            @pl.when((n == 0) & (s == 0))
            def _init():
                sum_ref[...] = jnp.zeros_like(sum_ref)
                sumsq_ref[...] = jnp.zeros_like(sumsq_ref)

            # 1x1x1 Conv3d == per-voxel channel mix; bias omitted (cancels in BN).
            x = vol_ref[...]                                       # (Cin, S_T)
            y = jnp.dot(wT_ref[...], x,
                        preferred_element_type=jnp.float32)        # (Cout, S_T)
            sum_ref[...] += jnp.sum(y, axis=1, keepdims=True)      # (Cout, 1)
            sumsq_ref[...] += jnp.sum(y * y, axis=1, keepdims=True)
            if use_cache:
                xcache_ref[idx] = x                # keep tile resident for pass 1

        @pl.when(p == 1)
        def _pass_norm_pool():
            @pl.when((n == 0) & (s == 0))
            def _fold_bn():
                # Fold BN into the conv weight + a per-channel shift:
                #   z = (scale*W) @ x + (beta - mean*scale)
                mean = sum_ref[...] * inv_count
                var = sumsq_ref[...] * inv_count - mean * mean     # biased var
                scale = gamma_ref[...] * jax.lax.rsqrt(var + eps)  # (Cout, 1)
                wsc_ref[...] = wT_ref[...] * scale                 # (Cout, Cin)
                shift_ref[...] = beta_ref[...] - mean * scale
                pooled_ref[...] = jnp.zeros_like(pooled_ref)

            x = xcache_ref[idx] if use_cache else vol_ref[...]     # (Cin, S_T)
            z = jnp.dot(wsc_ref[...], x,
                        preferred_element_type=jnp.float32) + shift_ref[...]
            z = jnp.maximum(z, neg_slope * z)                      # LeakyReLU(0.2)

            # Accumulate per-sample, per-channel pooled sums into column n.
            col = jnp.sum(z, axis=1, keepdims=True)                # (Cout, 1)
            onehot = (jax.lax.broadcasted_iota(jnp.int32, (1, N), 1) == n
                      ).astype(jnp.float32)                        # (1, N)
            pooled_ref[...] += col * onehot                        # (Cout, N)

            @pl.when((n == last_n) & (s == last_s))
            def _finalize():
                pooled = pooled_ref[...] * inv_S                   # avg pool
                # fused[n, p] = sum_c pooled[c, n] * pt[n, c, p]; contraction dim
                # Cout is far too small for the MXU -> VPU mul + sublane reduce.
                # N is small and static, so unroll over samples.
                for i in range(N):
                    w_i = pooled[:, i:i + 1]                       # (Cout, 1)
                    f_i = jnp.sum(w_i * pt_ref[i], axis=0,
                                  keepdims=True)                   # (1, P)
                    out_ref[pl.ds(i, 1), :] = jax.nn.sigmoid(f_i)

    return kernel


def _pick_s_tile(S, max_tile=8192):
    """Largest lane-aligned divisor of S <= max_tile; whole S if it is small."""
    if S <= max_tile:
        return S
    best_aligned = 0
    for cand in range(128, max_tile + 1, 128):
        if S % cand == 0:
            best_aligned = cand
    if best_aligned:
        return best_aligned
    # No lane-aligned divisor <= max_tile: fall back to the full extent
    # (a full-dim block is always legal, just a bigger VMEM tile).
    return S


def si_module_forward(point_feature, vol_feature, params, *,
                      s_tile=None, use_vmem_cache=None):
    """point_feature: (N, Cout, P) f32; vol_feature: (N, Cin, D, H, W) f32."""
    N, Cin, D, H, W = vol_feature.shape
    Cout, P = point_feature.shape[1], point_feature.shape[2]
    S = D * H * W

    # NCDHW -> (N, Cin, S): pure reshape (no transpose, no extra HBM pass).
    vol = vol_feature.reshape(N, Cin, S).astype(jnp.float32)
    wT = params["conv_w"].astype(jnp.float32).T                    # (Cout, Cin)
    gamma = params["bn_gamma"].reshape(Cout, 1).astype(jnp.float32)
    beta = params["bn_beta"].reshape(Cout, 1).astype(jnp.float32)
    pt = point_feature.astype(jnp.float32)                         # (N, Cout, P)

    if s_tile is None:
        s_tile = _pick_s_tile(S)
    assert S % s_tile == 0, (S, s_tile)
    n_s = S // s_tile

    # VMEM accounting (bytes): double-buffered vol tile + resident blocks + cache.
    tile_bytes = 2 * Cin * s_tile * 4
    resident_bytes = 4 * (N * Cout * P + N * P + Cout * Cin
                          + 4 * Cout + Cout * N)
    cache_bytes = N * Cin * S * 4
    if use_vmem_cache is None:
        # Cache the whole reshaped volume in VMEM when it fits comfortably:
        # pass 1 then reads from VMEM instead of re-fetching HBM (halves HBM
        # traffic for this memory-bound kernel).
        use_vmem_cache = (cache_bytes + resident_bytes + tile_bytes
                          ) <= 24 * 1024 * 1024

    scratch_shapes = [
        pltpu.VMEM((Cout, 1), jnp.float32),      # sum(conv)   per channel
        pltpu.VMEM((Cout, 1), jnp.float32),      # sum(conv^2) per channel
        pltpu.VMEM((Cout, Cin), jnp.float32),    # BN-scaled conv weight
        pltpu.VMEM((Cout, 1), jnp.float32),      # folded BN shift
        pltpu.VMEM((Cout, N), jnp.float32),      # per-sample pooled sums
    ]
    if use_vmem_cache:
        scratch_shapes.append(pltpu.VMEM((N * n_s, Cin, s_tile), jnp.float32))

    if use_vmem_cache:
        # pass 0: (n, 0, s); pass 1: constant (0, 0, 0) -> fetched once, no
        # per-tile HBM re-reads (data comes from the VMEM cache instead).
        vol_map = lambda p, n, s: ((1 - p) * n, 0, (1 - p) * s)
    else:
        vol_map = lambda p, n, s: (n, 0, s)

    kernel = _make_kernel(N=N, S_total=S, n_s=n_s, use_cache=use_vmem_cache)

    grid_spec = pltpu.PrefetchScalarGridSpec(
        num_scalar_prefetch=0,
        grid=(2, N, n_s),                            # (pass, sample, S tile)
        in_specs=[
            # vol tile: sample n, all Cin channels, S tile s (first dim squeezed)
            pl.BlockSpec((None, Cin, s_tile), vol_map),
            pl.BlockSpec((Cout, Cin), lambda p, n, s: (0, 0)),
            pl.BlockSpec((Cout, 1), lambda p, n, s: (0, 0)),
            pl.BlockSpec((Cout, 1), lambda p, n, s: (0, 0)),
            # point_feature only read at the final step; constant block index
            # keeps it resident (fetched once). For very large P, tile over P.
            pl.BlockSpec((N, Cout, P), lambda p, n, s: (0, 0, 0)),
        ],
        out_specs=pl.BlockSpec((N, P), lambda p, n, s: (0, 0)),
        scratch_shapes=scratch_shapes,
    )

    n_vol_reads = 1 if use_vmem_cache else 2
    cost = pl.CostEstimate(
        flops=int(2 * 2 * N * S * Cin * Cout + 7 * N * S * Cout + 2 * N * Cout * P),
        transcendentals=int(N * P + Cout),
        bytes_accessed=int(4 * (n_vol_reads * N * Cin * S + N * Cout * P + N * P
                                + Cin * Cout + 2 * Cout)),
    )

    needed = (cache_bytes if use_vmem_cache else 0) + resident_bytes + 2 * tile_bytes
    vmem_limit = int(min(128 * 1024 * 1024,
                         max(32 * 1024 * 1024, needed + (8 << 20))))

    out_2d = pl.pallas_call(
        kernel,
        out_shape=jax.ShapeDtypeStruct((N, P), jnp.float32),
        grid_spec=grid_spec,
        compiler_params=pltpu.CompilerParams(
            # BN stats + shared accumulators force sequential grid traversal.
            dimension_semantics=("arbitrary", "arbitrary", "arbitrary"),
            vmem_limit_bytes=vmem_limit,
        ),
        cost_estimate=cost,
    )(vol, wT, gamma, beta, pt)

    return out_2d.reshape(N, 1, P)   # lane-dense (N, P) in-kernel; 3-D outside


def si_module_reference(point_feature, vol_feature, params):
    """Pure-JAX reference of the PyTorch forward (training-mode BN, with bias)."""
    N, Cin, D, H, W = vol_feature.shape
    S = D * H * W
    x = jnp.transpose(vol_feature.reshape(N, Cin, S), (0, 2, 1))      # (N,S,Cin)
    y = jnp.einsum("nsc,co->nso", x, params["conv_w"]) + params["conv_b"]
    mean = jnp.mean(y, axis=(0, 1), keepdims=True)
    var = jnp.mean((y - mean) ** 2, axis=(0, 1), keepdims=True)
    y = (y - mean) / jnp.sqrt(var + 1e-5) * params["bn_gamma"] + params["bn_beta"]
    y = jnp.where(y >= 0.0, y, 0.2 * y)
    pooled = jnp.mean(y, axis=1)                                       # (N,Cout)
    fused = jnp.einsum("nc,ncp->np", pooled, point_feature)[:, None, :]
    return jax.nn.sigmoid(fused)


if __name__ == "__main__":
    # small shapes consistent with the module:
    #   args.pamir_vol_dim = Cin = 8, points_channel = Cout = 16,
    #   vol spatial 8x8x8 (S = 512), P = 128 sample points, batch N = 2
    N, Cin, Cout, D, H, W, P = 2, 8, 16, 8, 8, 8, 128

    key = jax.random.PRNGKey(0)
    k1, k2, k3, k4 = jax.random.split(key, 4)

    point_feature = jax.random.normal(k1, (N, Cout, P), dtype=jnp.float32)
    vol_feature = jax.random.normal(k2, (N, Cin, D, H, W), dtype=jnp.float32)

    # deterministic parameter init (Conv3d weight/bias; BN affine init = 1 / 0)
    params = {
        "conv_w": 0.1 * jax.random.normal(k3, (Cin, Cout), dtype=jnp.float32),
        "conv_b": 0.05 * jax.random.normal(k4, (Cout,), dtype=jnp.float32),
        "bn_gamma": jnp.ones((Cout,), dtype=jnp.float32),
        "bn_beta": jnp.zeros((Cout,), dtype=jnp.float32),
    }

    ref = si_module_reference(point_feature, vol_feature, params)

    # s_tile=256 -> 2 S tiles per sample, exercising the pipelined 2-pass grid.
    # Check both the VMEM-cached (single HBM read) and the streaming fallback.
    for cached in (True, False):
        out = si_module_forward(point_feature, vol_feature, params,
                                s_tile=256, use_vmem_cache=cached)
        out = jax.block_until_ready(out)
        assert out.shape == (N, 1, P), out.shape
        assert jnp.allclose(out, ref, atol=1e-4, rtol=1e-4), (
            cached, float(jnp.max(jnp.abs(out - ref))))

    print("KERNEL_OK")
</pallas_src>

<mosaic_0001>
module attributes {stable_mosaic.version = 11 : i64} {
  func.func @kernel(%arg0: i32, %arg1: i32, %arg2: i32, %arg3: memref<1x8x256xf32, #tpu.memory_space<vmem>>, %arg4: memref<16x8xf32, #tpu.memory_space<vmem>>, %arg5: memref<16x1xf32, #tpu.memory_space<vmem>>, %arg6: memref<16x1xf32, #tpu.memory_space<vmem>>, %arg7: memref<2x16x128xf32, #tpu.memory_space<vmem>>, %arg8: memref<2x128xf32, #tpu.memory_space<vmem>>, %arg9: memref<16x1xf32, #tpu.memory_space<vmem>>, %arg10: memref<16x1xf32, #tpu.memory_space<vmem>>, %arg11: memref<16x8xf32, #tpu.memory_space<vmem>>, %arg12: memref<16x1xf32, #tpu.memory_space<vmem>>, %arg13: memref<16x2xf32, #tpu.memory_space<vmem>>, %arg14: memref<4x8x256xf32, #tpu.memory_space<vmem>>) attributes {dimension_semantics = [#tpu.dimension_semantics<arbitrary>, #tpu.dimension_semantics<arbitrary>, #tpu.dimension_semantics<arbitrary>], iteration_bounds = array<i64: 2, 2, 2>, scalar_prefetch = 0 : i64, scratch_operands = 6 : i64, tpu.core_type = #tpu.core_type<tc>, window_params = [{transform_indices = @transform_0, window_bounds = array<i64: 1, 8, 256>}, {pipeline_mode = #tpu.pipeline_mode<synchronous>, transform_indices = @transform_1, window_bounds = array<i64: 16, 8>}, {pipeline_mode = #tpu.pipeline_mode<synchronous>, transform_indices = @transform_2, window_bounds = array<i64: 16, 1>}, {pipeline_mode = #tpu.pipeline_mode<synchronous>, transform_indices = @transform_3, window_bounds = array<i64: 16, 1>}, {pipeline_mode = #tpu.pipeline_mode<synchronous>, transform_indices = @transform_4, window_bounds = array<i64: 2, 16, 128>}, {pipeline_mode = #tpu.pipeline_mode<synchronous>, transform_indices = @transform_5, window_bounds = array<i64: 2, 128>}]} {
    %c2_i32 = arith.constant 2 : i32
    %0 = arith.muli %arg1, %c2_i32 : i32
    %1 = arith.addi %0, %arg2 : i32
    %c0_i32 = arith.constant 0 : i32
    %2 = arith.cmpi eq, %arg0, %c0_i32 : i32
    %3 = arith.extui %2 : i1 to i32
    %c0_i32_0 = arith.constant 0 : i32
    %4 = arith.cmpi ne, %3, %c0_i32_0 : i32
    scf.if %4 {
      %c0_i32_2 = arith.constant 0 : i32
      %8 = arith.cmpi eq, %arg1, %c0_i32_2 : i32
      %c0_i32_3 = arith.constant 0 : i32
      %9 = arith.cmpi eq, %arg2, %c0_i32_3 : i32
      %10 = arith.andi %8, %9 : i1
      %11 = arith.extui %10 : i1 to i32
      %c0_i32_4 = arith.constant 0 : i32
      %12 = arith.cmpi ne, %11, %c0_i32_4 : i32
      scf.if %12 {
        %cst_21 = arith.constant 0.000000e+00 : f32
        %32 = vector.broadcast %cst_21 : f32 to vector<16x1xf32>
        %c0_22 = arith.constant 0 : index
        %c0_23 = arith.constant 0 : index
        %33 = vector.load %arg9[%c0_22, %c0_23] : memref<16x1xf32, #tpu.memory_space<vmem>>, vector<16x1xf32>
        tpu.vector_store %arg9[%c0_22, %c0_23], %32 {strides = array<i32>} : memref<16x1xf32, #tpu.memory_space<vmem>>, vector<16x1xf32>,
        %cst_24 = arith.constant 0.000000e+00 : f32
        %34 = vector.broadcast %cst_24 : f32 to vector<16x1xf32>
        %c0_25 = arith.constant 0 : index
        %c0_26 = arith.constant 0 : index
        %35 = vector.load %arg10[%c0_25, %c0_26] : memref<16x1xf32, #tpu.memory_space<vmem>>, vector<16x1xf32>
        tpu.vector_store %arg10[%c0_25, %c0_26], %34 {strides = array<i32>} : memref<16x1xf32, #tpu.memory_space<vmem>>, vector<16x1xf32>,
      } else {
      }
      %c0 = arith.constant 0 : index
      %c0_5 = arith.constant 0 : index
      %c0_6 = arith.constant 0 : index
      %13 = vector.load %arg3[%c0, %c0_5, %c0_6] : memref<1x8x256xf32, #tpu.memory_space<vmem>>, vector<1x8x256xf32>
      %14 = vector.shape_cast %13 : vector<1x8x256xf32> to vector<8x256xf32>
      %c0_7 = arith.constant 0 : index
      %c0_8 = arith.constant 0 : index
      %15 = vector.load %arg4[%c0_7, %c0_8] : memref<16x8xf32, #tpu.memory_space<vmem>>, vector<16x8xf32>
      %cst = arith.constant dense<0.000000e+00> : vector<16x256xf32>
      %16 = tpu.matmul %15, %14, %cst {dimension_numbers = #tpu.dot_dimension_numbers<[1], [0], [0], [1], [0, 0, 1, 1], [], []>} : vector<16x8xf32>, vector<8x256xf32>, vector<16x256xf32> -> vector<16x256xf32>
      %c0_9 = arith.constant 0 : index
      %c0_10 = arith.constant 0 : index
      %17 = vector.load %arg9[%c0_9, %c0_10] : memref<16x1xf32, #tpu.memory_space<vmem>>, vector<16x1xf32>
      %cst_11 = arith.constant dense<0.000000e+00> : vector<16xf32>
      %18 = vector.multi_reduction <add>, %16, %cst_11 [1] : vector<16x256xf32> to vector<16xf32>
      %19 = vector.shape_cast %18 : vector<16xf32> to vector<16x1xf32>
      %20 = arith.addf %17, %19 : vector<16x1xf32>
      %c0_12 = arith.constant 0 : index
      %c0_13 = arith.constant 0 : index
      %21 = vector.load %arg9[%c0_12, %c0_13] : memref<16x1xf32, #tpu.memory_space<vmem>>, vector<16x1xf32>
      tpu.vector_store %arg9[%c0_12, %c0_13], %20 {strides = array<i32>} : memref<16x1xf32, #tpu.memory_space<vmem>>, vector<16x1xf32>,
      %c0_14 = arith.constant 0 : index
      %c0_15 = arith.constant 0 : index
      %22 = vector.load %arg10[%c0_14, %c0_15] : memref<16x1xf32, #tpu.memory_space<vmem>>, vector<16x1xf32>
      %23 = arith.mulf %16, %16 : vector<16x256xf32>
      %cst_16 = arith.constant dense<0.000000e+00> : vector<16xf32>
      %24 = vector.multi_reduction <add>, %23, %cst_16 [1] : vector<16x256xf32> to vector<16xf32>
      %25 = vector.shape_cast %24 : vector<16xf32> to vector<16x1xf32>
      %26 = arith.addf %22, %25 : vector<16x1xf32>
      %c0_17 = arith.constant 0 : index
      %c0_18 = arith.constant 0 : index
      %27 = vector.load %arg10[%c0_17, %c0_18] : memref<16x1xf32, #tpu.memory_space<vmem>>, vector<16x1xf32>
      tpu.vector_store %arg10[%c0_17, %c0_18], %26 {strides = array<i32>} : memref<16x1xf32, #tpu.memory_space<vmem>>, vector<16x1xf32>,
      %28 = arith.index_cast %1 : i32 to index
      %c0_19 = arith.constant 0 : index
      %c0_20 = arith.constant 0 : index
      %29 = vector.load %arg14[%28, %c0_19, %c0_20] : memref<4x8x256xf32, #tpu.memory_space<vmem>>, vector<1x8x256xf32>
      %30 = vector.shape_cast %29 : vector<1x8x256xf32> to vector<8x256xf32>
      %31 = vector.shape_cast %14 : vector<8x256xf32> to vector<1x8x256xf32>
      tpu.vector_store %arg14[%28, %c0_19, %c0_20], %31 {strides = array<i32>} : memref<4x8x256xf32, #tpu.memory_space<vmem>>, vector<1x8x256xf32>,
    } else {
    }
    %c1_i32 = arith.constant 1 : i32
    %5 = arith.cmpi eq, %arg0, %c1_i32 : i32
    %6 = arith.extui %5 : i1 to i32
    %c0_i32_1 = arith.constant 0 : i32
    %7 = arith.cmpi ne, %6, %c0_i32_1 : i32
    scf.if %7 {
      %c0_i32_2 = arith.constant 0 : i32
      %8 = arith.cmpi eq, %arg1, %c0_i32_2 : i32
      %c0_i32_3 = arith.constant 0 : i32
      %9 = arith.cmpi eq, %arg2, %c0_i32_3 : i32
      %10 = arith.andi %8, %9 : i1
      %11 = arith.extui %10 : i1 to i32
      %c0_i32_4 = arith.constant 0 : i32
      %12 = arith.cmpi ne, %11, %c0_i32_4 : i32
      scf.if %12 {
        %c0_19 = arith.constant 0 : index
        %c0_20 = arith.constant 0 : index
        %42 = vector.load %arg9[%c0_19, %c0_20] : memref<16x1xf32, #tpu.memory_space<vmem>>, vector<16x1xf32>
        %cst_21 = arith.constant 9.765625E-4 : f32
        %43 = vector.broadcast %cst_21 : f32 to vector<16x1xf32>
        %44 = arith.mulf %42, %43 : vector<16x1xf32>
        %c0_22 = arith.constant 0 : index
        %c0_23 = arith.constant 0 : index
        %45 = vector.load %arg10[%c0_22, %c0_23] : memref<16x1xf32, #tpu.memory_space<vmem>>, vector<16x1xf32>
        %cst_24 = arith.constant 9.765625E-4 : f32
        %46 = vector.broadcast %cst_24 : f32 to vector<16x1xf32>
        %47 = arith.mulf %45, %46 : vector<16x1xf32>
        %48 = arith.mulf %44, %44 : vector<16x1xf32>
        %49 = arith.subf %47, %48 : vector<16x1xf32>
        %c0_25 = arith.constant 0 : index
        %c0_26 = arith.constant 0 : index
        %50 = vector.load %arg5[%c0_25, %c0_26] : memref<16x1xf32, #tpu.memory_space<vmem>>, vector<16x1xf32>
        %cst_27 = arith.constant 9.99999974E-6 : f32
        %51 = vector.broadcast %cst_27 : f32 to vector<16x1xf32>
        %52 = arith.addf %49, %51 : vector<16x1xf32>
        %53 = math.rsqrt %52 : vector<16x1xf32>
        %54 = arith.mulf %50, %53 : vector<16x1xf32>
        %c0_28 = arith.constant 0 : index
        %c0_29 = arith.constant 0 : index
        %55 = vector.load %arg4[%c0_28, %c0_29] : memref<16x8xf32, #tpu.memory_space<vmem>>, vector<16x8xf32>
        %56 = vector.broadcast %54 : vector<16x1xf32> to vector<16x8xf32>
        %57 = arith.mulf %55, %56 : vector<16x8xf32>
        %c0_30 = arith.constant 0 : index
        %c0_31 = arith.constant 0 : index
        %58 = vector.load %arg11[%c0_30, %c0_31] : memref<16x8xf32, #tpu.memory_space<vmem>>, vector<16x8xf32>
        tpu.vector_store %arg11[%c0_30, %c0_31], %57 {strides = array<i32>} : memref<16x8xf32, #tpu.memory_space<vmem>>, vector<16x8xf32>,
        %c0_32 = arith.constant 0 : index
        %c0_33 = arith.constant 0 : index
        %59 = vector.load %arg6[%c0_32, %c0_33] : memref<16x1xf32, #tpu.memory_space<vmem>>, vector<16x1xf32>
        %60 = arith.mulf %44, %54 : vector<16x1xf32>
        %61 = arith.subf %59, %60 : vector<16x1xf32>
        %c0_34 = arith.constant 0 : index
        %c0_35 = arith.constant 0 : index
        %62 = vector.load %arg12[%c0_34, %c0_35] : memref<16x1xf32, #tpu.memory_space<vmem>>, vector<16x1xf32>
        tpu.vector_store %arg12[%c0_34, %c0_35], %61 {strides = array<i32>} : memref<16x1xf32, #tpu.memory_space<vmem>>, vector<16x1xf32>,
        %cst_36 = arith.constant 0.000000e+00 : f32
        %63 = vector.broadcast %cst_36 : f32 to vector<16x2xf32>
        %c0_37 = arith.constant 0 : index
        %c0_38 = arith.constant 0 : index
        %64 = vector.load %arg13[%c0_37, %c0_38] : memref<16x2xf32, #tpu.memory_space<vmem>>, vector<16x2xf32>
        tpu.vector_store %arg13[%c0_37, %c0_38], %63 {strides = array<i32>} : memref<16x2xf32, #tpu.memory_space<vmem>>, vector<16x2xf32>,
      } else {
      }
      %13 = arith.index_cast %1 : i32 to index
      %c0 = arith.constant 0 : index
      %c0_5 = arith.constant 0 : index
      %14 = vector.load %arg14[%13, %c0, %c0_5] : memref<4x8x256xf32, #tpu.memory_space<vmem>>, vector<1x8x256xf32>
      %15 = vector.shape_cast %14 : vector<1x8x256xf32> to vector<8x256xf32>
      %c0_6 = arith.constant 0 : index
      %c0_7 = arith.constant 0 : index
      %16 = vector.load %arg11[%c0_6, %c0_7] : memref<16x8xf32, #tpu.memory_space<vmem>>, vector<16x8xf32>
      %cst = arith.constant dense<0.000000e+00> : vector<16x256xf32>
      %17 = tpu.matmul %16, %15, %cst {dimension_numbers = #tpu.dot_dimension_numbers<[1], [0], [0], [1], [0, 0, 1, 1], [], []>} : vector<16x8xf32>, vector<8x256xf32>, vector<16x256xf32> -> vector<16x256xf32>
      %c0_8 = arith.constant 0 : index
      %c0_9 = arith.constant 0 : index
      %18 = vector.load %arg12[%c0_8, %c0_9] : memref<16x1xf32, #tpu.memory_space<vmem>>, vector<16x1xf32>
      %19 = vector.broadcast %18 : vector<16x1xf32> to vector<16x256xf32>
      %20 = arith.addf %17, %19 : vector<16x256xf32>
      %cst_10 = arith.constant 2.000000e-01 : f32
      %21 = vector.broadcast %cst_10 : f32 to vector<16x256xf32>
      %22 = arith.mulf %21, %20 : vector<16x256xf32>
      %23 = arith.maximumf %20, %22 : vector<16x256xf32>
      %cst_11 = arith.constant dense<0.000000e+00> : vector<16xf32>
      %24 = vector.multi_reduction <add>, %23, %cst_11 [1] : vector<16x256xf32> to vector<16xf32>
      %25 = vector.shape_cast %24 : vector<16xf32> to vector<16x1xf32>
      %26 = tpu.iota {dimensions = array<i32: 1>} : vector<1x2xi32>
      %27 = vector.broadcast %arg1 : i32 to vector<1x2xi32>
      %28 = arith.cmpi eq, %26, %27 : vector<1x2xi32>
      %29 = arith.extui %28 : vector<1x2xi1> to vector<1x2xi32>
      %30 = arith.sitofp %29 : vector<1x2xi32> to vector<1x2xf32>
      %c0_12 = arith.constant 0 : index
      %c0_13 = arith.constant 0 : index
      %31 = vector.load %arg13[%c0_12, %c0_13] : memref<16x2xf32, #tpu.memory_space<vmem>>, vector<16x2xf32>
      %32 = vector.broadcast %25 : vector<16x1xf32> to vector<16x2xf32>
      %33 = vector.broadcast %30 : vector<1x2xf32> to vector<16x2xf32>
      %34 = arith.mulf %32, %33 : vector<16x2xf32>
      %35 = arith.addf %31, %34 : vector<16x2xf32>
      %c0_14 = arith.constant 0 : index
      %c0_15 = arith.constant 0 : index
      %36 = vector.load %arg13[%c0_14, %c0_15] : memref<16x2xf32, #tpu.memory_space<vmem>>, vector<16x2xf32>
      tpu.vector_store %arg13[%c0_14, %c0_15], %35 {strides = array<i32>} : memref<16x2xf32, #tpu.memory_space<vmem>>, vector<16x2xf32>,
      %c1_i32_16 = arith.constant 1 : i32
      %37 = arith.cmpi eq, %arg1, %c1_i32_16 : i32
      %c1_i32_17 = arith.constant 1 : i32
      %38 = arith.cmpi eq, %arg2, %c1_i32_17 : i32
      %39 = arith.andi %37, %38 : i1
      %40 = arith.extui %39 : i1 to i32
      %c0_i32_18 = arith.constant 0 : i32
      %41 = arith.cmpi ne, %40, %c0_i32_18 : i32
      scf.if %41 {
        %c0_19 = arith.constant 0 : index
        %c0_20 = arith.constant 0 : index
        %42 = vector.load %arg13[%c0_19, %c0_20] : memref<16x2xf32, #tpu.memory_space<vmem>>, vector<16x2xf32>
        %cst_21 = arith.constant 0.001953125 : f32
        %43 = vector.broadcast %cst_21 : f32 to vector<16x2xf32>
        %44 = arith.mulf %42, %43 : vector<16x2xf32>
        %45 = vector.extract_strided_slice %44 {offsets = [0, 0], sizes = [16, 1], strides = [1, 1]} : vector<16x2xf32> to vector<16x1xf32>
        %c0_22 = arith.constant 0 : index
        %c0_23 = arith.constant 0 : index
        %c0_24 = arith.constant 0 : index
        %46 = vector.load %arg7[%c0_22, %c0_23, %c0_24] : memref<2x16x128xf32, #tpu.memory_space<vmem>>, vector<1x16x128xf32>
        %47 = vector.shape_cast %46 : vector<1x16x128xf32> to vector<16x128xf32>
        %48 = vector.broadcast %45 : vector<16x1xf32> to vector<16x128xf32>
        %49 = arith.mulf %48, %47 : vector<16x128xf32>
        %cst_25 = arith.constant dense<0.000000e+00> : vector<128xf32>
        %50 = vector.multi_reduction <add>, %49, %cst_25 [0] : vector<16x128xf32> to vector<128xf32>
        %51 = vector.shape_cast %50 : vector<128xf32> to vector<1x128xf32>
        %52 = arith.negf %51 : vector<1x128xf32>
        %53 = math.exp %52 : vector<1x128xf32>
        %cst_26 = arith.constant 1.000000e+00 : f32
        %54 = vector.broadcast %cst_26 : f32 to vector<1x128xf32>
        %55 = arith.addf %54, %53 : vector<1x128xf32>
        %56 = arith.divf %54, %55 : vector<1x128xf32>
        %c0_27 = arith.constant 0 : index
        %c0_28 = arith.constant 0 : index
        %57 = vector.load %arg8[%c0_27, %c0_28] : memref<2x128xf32, #tpu.memory_space<vmem>>, vector<1x128xf32>
        tpu.vector_store %arg8[%c0_27, %c0_28], %56 {strides = array<i32>} : memref<2x128xf32, #tpu.memory_space<vmem>>, vector<1x128xf32>,
        %58 = vector.extract_strided_slice %44 {offsets = [0, 1], sizes = [16, 1], strides = [1, 1]} : vector<16x2xf32> to vector<16x1xf32>
        %c1 = arith.constant 1 : index
        %c0_29 = arith.constant 0 : index
        %c0_30 = arith.constant 0 : index
        %59 = vector.load %arg7[%c1, %c0_29, %c0_30] : memref<2x16x128xf32, #tpu.memory_space<vmem>>, vector<1x16x128xf32>
        %60 = vector.shape_cast %59 : vector<1x16x128xf32> to vector<16x128xf32>
        %61 = vector.broadcast %58 : vector<16x1xf32> to vector<16x128xf32>
        %62 = arith.mulf %61, %60 : vector<16x128xf32>
        %cst_31 = arith.constant dense<0.000000e+00> : vector<128xf32>
        %63 = vector.multi_reduction <add>, %62, %cst_31 [0] : vector<16x128xf32> to vector<128xf32>
        %64 = vector.shape_cast %63 : vector<128xf32> to vector<1x128xf32>
        %65 = arith.negf %64 : vector<1x128xf32>
        %66 = math.exp %65 : vector<1x128xf32>
        %cst_32 = arith.constant 1.000000e+00 : f32
        %67 = vector.broadcast %cst_32 : f32 to vector<1x128xf32>
        %68 = arith.addf %67, %66 : vector<1x128xf32>
        %69 = arith.divf %67, %68 : vector<1x128xf32>
        %c1_33 = arith.constant 1 : index
        %c0_34 = arith.constant 0 : index
        %70 = vector.load %arg8[%c1_33, %c0_34] : memref<2x128xf32, #tpu.memory_space<vmem>>, vector<1x128xf32>
        tpu.vector_store %arg8[%c1_33, %c0_34], %69 {strides = array<i32>} : memref<2x128xf32, #tpu.memory_space<vmem>>, vector<1x128xf32>,
      } else {
      }
    } else {
    }
    return
  }
  func.func @transform_0(%arg0: i32, %arg1: i32, %arg2: i32) -> (i32, i32, i32) {
    %c1_i32 = arith.constant 1 : i32
    %0 = arith.subi %c1_i32, %arg0 : i32
    %1 = arith.muli %0, %arg1 : i32
    %c1_i32_0 = arith.constant 1 : i32
    %2 = arith.subi %c1_i32_0, %arg0 : i32
    %3 = arith.muli %2, %arg2 : i32
    %c0_i32 = arith.constant 0 : i32
    %c0_i32_1 = arith.constant 0 : i32
    return %1, %c0_i32, %3 : i32, i32, i32
  }
  func.func @transform_1(%arg0: i32, %arg1: i32, %arg2: i32) -> (i32, i32) {
    %c0_i32 = arith.constant 0 : i32
    %c0_i32_0 = arith.constant 0 : i32
    %c0_i32_1 = arith.constant 0 : i32
    return %c0_i32, %c0_i32_0 : i32, i32
  }
  func.func @transform_2(%arg0: i32, %arg1: i32, %arg2: i32) -> (i32, i32) {
    %c0_i32 = arith.constant 0 : i32
    %c0_i32_0 = arith.constant 0 : i32
    %c0_i32_1 = arith.constant 0 : i32
    return %c0_i32, %c0_i32_0 : i32, i32
  }
  func.func @transform_3(%arg0: i32, %arg1: i32, %arg2: i32) -> (i32, i32) {
    %c0_i32 = arith.constant 0 : i32
    %c0_i32_0 = arith.constant 0 : i32
    %c0_i32_1 = arith.constant 0 : i32
    return %c0_i32, %c0_i32_0 : i32, i32
  }
  func.func @transform_4(%arg0: i32, %arg1: i32, %arg2: i32) -> (i32, i32, i32) {
    %c0_i32 = arith.constant 0 : i32
    %c0_i32_0 = arith.constant 0 : i32
    %c0_i32_1 = arith.constant 0 : i32
    %c0_i32_2 = arith.constant 0 : i32
    return %c0_i32, %c0_i32_0, %c0_i32_1 : i32, i32, i32
  }
  func.func @transform_5(%arg0: i32, %arg1: i32, %arg2: i32) -> (i32, i32) {
    %c0_i32 = arith.constant 0 : i32
    %c0_i32_0 = arith.constant 0 : i32
    %c0_i32_1 = arith.constant 0 : i32
    return %c0_i32, %c0_i32_0 : i32, i32
  }
}

</mosaic_0001>

<llo_original>
// kernel: tpu_custom_call.1
$region0: #{tpu_custom_call.1}
  #allocation0 [shape = 'u32[]', space=smem, size = 0x4, offset = 0x4, fixed_abs, tag = 'smem constant byte address 0x4 - core index']
  #allocation1 [shape = 'u32[72,128]{1,0:T(1,128)}', space=vmem, size = 0x9000, scoped, tag = 'internal scratch']
  #allocation2 [shape = 'f32[16,1]{1,0:T(8,128)}', space=vmem, size = 0x2000, scoped, tag = 'scratch operand']
  #allocation3 [shape = 'f32[16,1]{1,0:T(8,128)}', space=vmem, size = 0x2000, scoped, tag = 'scratch operand']
  #allocation4 [shape = 'f32[16,8]{1,0:T(8,128)}', space=vmem, size = 0x2000, scoped, tag = 'scratch operand']
  #allocation5 [shape = 'f32[16,1]{1,0:T(8,128)}', space=vmem, size = 0x2000, scoped, tag = 'scratch operand']
  #allocation6 [shape = 'f32[16,2]{1,0:T(8,128)}', space=vmem, size = 0x2000, scoped, tag = 'scratch operand']
  #allocation7 [shape = 'f32[4,8,256]{2,1,0:T(8,128)}', space=vmem, size = 0x8000, scoped, tag = 'scratch operand']
  %s0 = inlined_call_operand.hbm [shape: f32[2,8,512], index: 0, kind: input, shape index: {}]
  %s1 = inlined_call_operand.vmem [shape: f32[16,8], index: 1, kind: input, shape index: {}]
  %s2 = inlined_call_operand.vmem [shape: f32[16,1], index: 2, kind: input, shape index: {}]
  %s3 = inlined_call_operand.vmem [shape: f32[16,1], index: 3, kind: input, shape index: {}]
  %s4 = inlined_call_operand.vmem [shape: f32[2,16,128], index: 4, kind: input, shape index: {}]
  %s5 = inlined_call_operand.hbm [shape: f32[2,128], index: 5, kind: output, shape index: {}]
  %s6 = sld [smem:[#allocation0]]
  $region77: #{tpu_custom_call.1} parent=0
    _
  %s8 = ssub.s32 1, %s6
  %s9 = scalar_select 0, %s8, %s6
  $region1: #{tpu_custom_call.1} parent=0
    #allocation8 [shape = 'u8[16384]{0}', space=vmem, size = 0x4000, scoped, tag = 'input window, operand 0']
    #allocation9 [shape = 's32[2]{0}', space=sflag, size = 0x8, scoped, tag = 'scoped memory for tpu_custom_call.1']
    #allocation10 [shape = 's32[2]{0}', space=sflag, size = 0x8, scoped, tag = 'scoped memory for tpu_custom_call.1']
    #allocation11 [shape = 'u8[1024]{0}', space=vmem, size = 0x400, scoped, tag = 'output window, operand 0, single buffered']
    %10 = vsyncpa [#allocation9], 0
    %s11 = scalar_lea.sflag [#allocation9], 1
    %12 = vsyncpa %s11, 0
    %13 = vsyncpa [#allocation10], 0
    loop: start=0, step=1, limit=10
    $region2: #{tpu_custom_call.1} parent=1 // loop_pre_header
      _
    $region3: #{tpu_custom_call.1} parent=1 // loop_header
      %s15 = sphi 0, %s19
      %p16 = scmp.ge.s32.totalorder %s15, 10
      %s22 = sphi 0, %s41
      %s23 = sphi 0, %s37
      %s24 = sphi 0, %s33
      %s25 = sphi 0, %s22
      %s26 = sphi 0, %s23
      %s27 = sphi 0, %s24
      %s28 = sphi 0, %s25
      %s29 = sphi 0, %s26
      %s30 = sphi 0, %s27
      %s52 = sphi 0, %s54
      %s55 = sphi 0, %s52
      %s56 = sphi 0, %s55
      %s72 = sphi 0, %s56
      %s76 = sphi 0, %s76
      %s78 = sphi 0, %s76
      %s79 = sphi 0, %s78
      %s93 = sphi 0, %s79
      %s97 = sphi 0, %s97
      %s99 = sphi 0, %s97
      %s100 = sphi 0, %s99
      %s114 = sphi 0, %s100
      %s118 = sphi 0, %s118
      %s120 = sphi 0, %s118
      %s121 = sphi 0, %s120
      %s135 = sphi 0, %s121
      %s139 = sphi 0, %s139
      %s141 = sphi 0, %s139
      %s142 = sphi 0, %s141
      %s156 = sphi 0, %s142
      %s160 = sphi 0, %s160
      %s162 = sphi 0, %s160
      %s163 = sphi 0, %s162
      %s177 = sphi 0, %s163
    $region4: #{tpu_custom_call.1} parent=1 // loop_header_branch
      %18 = sbr.rel (%p16) target = $region8
    $region5: #{tpu_custom_call.1} parent=1 // loop_body
      %s20 = ssub.s32 %s15, 1
      %s21 = ssub.s32 %s15, 2
      %s31 = sadd.s32 1, %s24
      %p32 = scmp.ge.s32.totalorder %s31, 2
      %s33 = scalar_select %p32, 0, %s31
      %s34 = sadd.s32 1, %s23
      %s35 = scalar_select %p32, %s34, %s23
      %p36 = scmp.ge.s32.totalorder %s35, 2
      %s37 = scalar_select %p36, 0, %s35
      %s38 = sadd.s32 1, %s22
      %s39 = scalar_select %p36, %s38, %s22
      %p40 = scmp.ge.s32.totalorder %s39, 2
      %s41 = scalar_select %p40, 0, %s39
      %s42 = ssub.s32 1, %s22
      %s43 = smul.u32 %s42, %s23
      %s44 = smul.u32 %s42, %s24
      %s45 = ssub.s32 1, %s41
      %s46 = smul.u32 %s45, %s37
      %s47 = smul.u32 %s45, %s33
      %s48 = ssub.s32 %s43, %s46
      %s49 = ssub.s32 %s44, %s47
      %s50 = sor.u32 %s48, %s49
      %p51 = scmp.eq.s32.totalorder %s50, 0
      %s53 = sadd.s32 %s52, 1
      %s54 = scalar_select %p51, %s52, %s53
      %p57 = pneg %p51
      %p58 = scmp.eq.s32.totalorder %s15, 7
      %p59 = por %p57, %p58
      %p60 = scmp.ne.s32.totalorder %s52, %s55
      %p61 = scmp.eq.s32.totalorder %s15, 0
      %p62 = por %p60, %p61
      %p63 = scmp.ne.s32.totalorder %s52, %s55
      %p64 = scmp.eq.s32.totalorder %s20, 7
      %p65 = por %p63, %p64
      %p66 = scmp.ne.s32.totalorder %s55, %s56
      %p67 = scmp.eq.s32.totalorder %s20, 0
      %p68 = por %p66, %p67
      %p69 = scmp.ne.s32.totalorder %s55, %s56
      %p70 = scmp.eq.s32.totalorder %s21, 7
      %p71 = por %p69, %p70
      %p73 = scmp.ne.s32.totalorder %s56, %s72
      %p74 = scmp.eq.s32.totalorder %s21, 0
      %p75 = por %p73, %p74
      %s77 = sadd.s32 %s76, 1
      %p80 = scmp.eq.s32.totalorder %s15, 7
      %p81 = scmp.ne.s32.totalorder %s76, %s78
      %p82 = scmp.eq.s32.totalorder %s15, 0
      %p83 = por %p81, %p82
      %p84 = scmp.ne.s32.totalorder %s76, %s78
      %p85 = scmp.eq.s32.totalorder %s20, 7
      %p86 = por %p84, %p85
      %p87 = scmp.ne.s32.totalorder %s78, %s79
      %p88 = scmp.eq.s32.totalorder %s20, 0
      %p89 = por %p87, %p88
      %p90 = scmp.ne.s32.totalorder %s78, %s79
      %p91 = scmp.eq.s32.totalorder %s21, 7
      %p92 = por %p90, %p91
      %p94 = scmp.ne.s32.totalorder %s79, %s93
      %p95 = scmp.eq.s32.totalorder %s21, 0
      %p96 = por %p94, %p95
      %s98 = sadd.s32 %s97, 1
      %p101 = scmp.eq.s32.totalorder %s15, 7
      %p102 = scmp.ne.s32.totalorder %s97, %s99
      %p103 = scmp.eq.s32.totalorder %s15, 0
      %p104 = por %p102, %p103
      %p105 = scmp.ne.s32.totalorder %s97, %s99
      %p106 = scmp.eq.s32.totalorder %s20, 7
      %p107 = por %p105, %p106
      %p108 = scmp.ne.s32.totalorder %s99, %s100
      %p109 = scmp.eq.s32.totalorder %s20, 0
      %p110 = por %p108, %p109
      %p111 = scmp.ne.s32.totalorder %s99, %s100
      %p112 = scmp.eq.s32.totalorder %s21, 7
      %p113 = por %p111, %p112
      %p115 = scmp.ne.s32.totalorder %s100, %s114
      %p116 = scmp.eq.s32.totalorder %s21, 0
      %p117 = por %p115, %p116
      %s119 = sadd.s32 %s118, 1
      %p122 = scmp.eq.s32.totalorder %s15, 7
      %p123 = scmp.ne.s32.totalorder %s118, %s120
      %p124 = scmp.eq.s32.totalorder %s15, 0
      %p125 = por %p123, %p124
      %p126 = scmp.ne.s32.totalorder %s118, %s120
      %p127 = scmp.eq.s32.totalorder %s20, 7
      %p128 = por %p126, %p127
      %p129 = scmp.ne.s32.totalorder %s120, %s121
      %p130 = scmp.eq.s32.totalorder %s20, 0
      %p131 = por %p129, %p130
      %p132 = scmp.ne.s32.totalorder %s120, %s121
      %p133 = scmp.eq.s32.totalorder %s21, 7
      %p134 = por %p132, %p133
      %p136 = scmp.ne.s32.totalorder %s121, %s135
      %p137 = scmp.eq.s32.totalorder %s21, 0
      %p138 = por %p136, %p137
      %s140 = sadd.s32 %s139, 1
      %p143 = scmp.eq.s32.totalorder %s15, 7
      %p144 = scmp.ne.s32.totalorder %s139, %s141
      %p145 = scmp.eq.s32.totalorder %s15, 0
      %p146 = por %p144, %p145
      %p147 = scmp.ne.s32.totalorder %s139, %s141
      %p148 = scmp.eq.s32.totalorder %s20, 7
      %p149 = por %p147, %p148
      %p150 = scmp.ne.s32.totalorder %s141, %s142
      %p151 = scmp.eq.s32.totalorder %s20, 0
      %p152 = por %p150, %p151
      %p153 = scmp.ne.s32.totalorder %s141, %s142
      %p154 = scmp.eq.s32.totalorder %s21, 7
      %p155 = por %p153, %p154
      %p157 = scmp.ne.s32.totalorder %s142, %s156
      %p158 = scmp.eq.s32.totalorder %s21, 0
      %p159 = por %p157, %p158
      %s161 = sadd.s32 %s160, 1
      %p164 = scmp.eq.s32.totalorder %s15, 7
      %p165 = scmp.ne.s32.totalorder %s160, %s162
      %p166 = scmp.eq.s32.totalorder %s15, 0
      %p167 = por %p165, %p166
      %p168 = scmp.ne.s32.totalorder %s160, %s162
      %p169 = scmp.eq.s32.totalorder %s20, 7
      %p170 = por %p168, %p169
      %p171 = scmp.ne.s32.totalorder %s162, %s163
      %p172 = scmp.eq.s32.totalorder %s20, 0
      %p173 = por %p171, %p172
      %p174 = scmp.ne.s32.totalorder %s162, %s163
      %p175 = scmp.eq.s32.totalorder %s21, 7
      %p176 = por %p174, %p175
      %p178 = scmp.ne.s32.totalorder %s163, %s177
      %p179 = scmp.eq.s32.totalorder %s21, 0
      %p180 = por %p178, %p179
      %p181 = scmp.le.s32.totalorder 1, %s15
      %p182 = scmp.lt.s32.totalorder %s15, 9
      %p183 = pnand %p181, %p182
      %p184 = pneg %p183
      // Predicated region
      $region9: #{tpu_custom_call.1} parent=5 // pred_check
        _
      $region10: #{tpu_custom_call.1} parent=5 // pred_check_branch
        %186 = sbr.rel (%p183) target = $region12
      $region11: #{tpu_custom_call.1} parent=5 // pred_region
        %s187 = ssub.s32 %s15, 1
        // Predicated region
        $region13: #{tpu_custom_call.1} parent=11 // pred_check
          %p188 = pneg %p89
        $region14: #{tpu_custom_call.1} parent=11 // pred_check_branch
          %190 = sbr.rel (%p188) target = $region16
        $region15: #{tpu_custom_call.1} parent=11 // pred_region
          _
        $region16: #{tpu_custom_call.1} parent=11 // pred_fallthru
          _
        // Predicated region
        $region17: #{tpu_custom_call.1} parent=11 // pred_check
          %p191 = pneg %p110
        $region18: #{tpu_custom_call.1} parent=11 // pred_check_branch
          %193 = sbr.rel (%p191) target = $region20
        $region19: #{tpu_custom_call.1} parent=11 // pred_region
          _
        $region20: #{tpu_custom_call.1} parent=11 // pred_fallthru
          _
        // Predicated region
        $region21: #{tpu_custom_call.1} parent=11 // pred_check
          %p194 = pneg %p131
        $region22: #{tpu_custom_call.1} parent=11 // pred_check_branch
          %196 = sbr.rel (%p194) target = $region24
        $region23: #{tpu_custom_call.1} parent=11 // pred_region
          _
        $region24: #{tpu_custom_call.1} parent=11 // pred_fallthru
          _
        // Predicated region
        $region25: #{tpu_custom_call.1} parent=11 // pred_check
          %p197 = pneg %p152
        $region26: #{tpu_custom_call.1} parent=11 // pred_check_branch
          %199 = sbr.rel (%p197) target = $region28
        $region27: #{tpu_custom_call.1} parent=11 // pred_region
          _
        $region28: #{tpu_custom_call.1} parent=11 // pred_fallthru
          _
      $region12: #{tpu_custom_call.1} parent=5 // pred_fallthru
        _
      %p200 = scmp.lt.s32.totalorder %s15, 8
      // Predicated region
      $region29: #{tpu_custom_call.1} parent=5 // pred_check
        %p201 = pneg %p200
      $region30: #{tpu_custom_call.1} parent=5 // pred_check_branch
        %203 = sbr.rel (%p201) target = $region32
      $region31: #{tpu_custom_call.1} parent=5 // pred_region
        // Predicated region
        $region33: #{tpu_custom_call.1} parent=31 // pred_check
          %p204 = pneg %p62
        $region34: #{tpu_custom_call.1} parent=31 // pred_check_branch
          %206 = sbr.rel (%p204) target = $region36
        $region35: #{tpu_custom_call.1} parent=31 // pred_region
          %s207 = sand.u32 %s52, 1
          %s208 = scalar_lea.sflag [#allocation9], %s207
          %s209 = sand.u32 %s52, 1
          %s210 = smul.addr %s209, 16
          %s211 = scalar_lea.vmem [#allocation8], %s210
          %s212 = ssub.s32 1, %s22
          %s213 = smul.u32 %s212, %s23
          %s214 = smul.u32 %s212, %s24
          %s215 = smul.u32 2, %s214
          %217 = vsyncadd %s208, 0
          %s218 = smul.addr %s213, 4
          %s219 = sadd.s32 %s215, %s218
          %s220 = smul.addr %s219, 8
          %s221 = scalar_lea.hbm %s0, %s220
          %s223 = sshll.u32 %s221, 4
          %s224 = int_to_ptr.hbm [resolvable:$true] %s223
          %s225 = sshll.u32 %s211, 4
          %s226 = int_to_ptr.vmem [resolvable:$true] %s225
          %228 = dma.hbm_to_vmem [thread:$0]  %s224, 256, %s226, %s208
        $region36: #{tpu_custom_call.1} parent=31 // pred_fallthru
          _
      $region32: #{tpu_custom_call.1} parent=5 // pred_fallthru
        _
      %p229 = scmp.le.s32.totalorder 1, %s15
      %p230 = scmp.lt.s32.totalorder %s15, 9
      %p231 = pnand %p229, %p230
      %p232 = pneg %p231
      // Predicated region
      $region37: #{tpu_custom_call.1} parent=5 // pred_check
        _
      $region38: #{tpu_custom_call.1} parent=5 // pred_check_branch
        %234 = sbr.rel (%p231) target = $region40
      $region39: #{tpu_custom_call.1} parent=5 // pred_region
        %s235 = ssub.s32 %s15, 1
        %s236 = sand.u32 %s55, 1
        %s237 = scalar_lea.sflag [#allocation9], %s236
        %s238 = sand.u32 %s55, 1
        %s239 = smul.addr %s238, 16
        %s240 = scalar_lea.vmem [#allocation8], %s239
        // Predicated region
        $region41: #{tpu_custom_call.1} parent=39 // pred_check
          %p241 = pneg %p68
        $region42: #{tpu_custom_call.1} parent=39 // pred_check_branch
          %243 = sbr.rel (%p241) target = $region44
        $region43: #{tpu_custom_call.1} parent=39 // pred_region
          %245 = dma.done %s237, 256
        $region44: #{tpu_custom_call.1} parent=39 // pred_fallthru
          _
        %s246 = sand.u32 %s55, 1
        %s247 = scalar_lea.sflag [#allocation9], %s246
        %s248 = sand.u32 %s55, 1
        %s249 = smul.addr %s248, 16
        %s250 = scalar_lea.vmem [#allocation8], %s249
        %p251 = pneg %p68
        %p252 = pneg %p65
        %p253 = pneg %p89
        %p254 = pneg %p86
        %p255 = pneg %p110
        %p256 = pneg %p107
        %p257 = pneg %p131
        %p258 = pneg %p128
        %p259 = pneg %p152
        %p260 = pneg %p149
        %p261 = pneg %p173
        %p262 = pneg %p170
        %s263 = ssub.s32 1, %s25
        %s264 = smul.u32 %s263, %s26
        %s265 = smul.u32 %s263, %s27
        %s266 = smul.u32 2, %s265
        %s267 = smul.u32 %s26, 2
        %s268 = sadd.s32 %s267, %s27
        %p269 = scmp.eq.s32.totalorder %s25, 0
        // Predicated region
        $region45: #{tpu_custom_call.1} parent=39 // pred_check
          %p270 = pneg %p269
        $region46: #{tpu_custom_call.1} parent=39 // pred_check_branch
          %272 = sbr.rel (%p270) target = $region48
        $region47: #{tpu_custom_call.1} parent=39 // pred_region
          %p273 = scmp.eq.s32.totalorder %s26, 0
          %p274 = scmp.eq.s32.totalorder %s27, 0
          %p275 = pnand %p273, %p274
          %p276 = pneg %p275
          // Predicated region
          $region49: #{tpu_custom_call.1} parent=47 // pred_check
            _
          $region50: #{tpu_custom_call.1} parent=47 // pred_check_branch
            %278 = sbr.rel (%p275) target = $region52
          $region51: #{tpu_custom_call.1} parent=47 // pred_region
            %vm279 = vcmask 7168
            %280 = vst.msk [vmem:[#allocation2] sm:$0xff] %vm279, 0.0
            %281 = vst.msk [vmem:[#allocation2 + $0x8] sm:$0xff] %vm279, 0.0
            %282 = vst.msk [vmem:[#allocation3] sm:$0xff] %vm279, 0.0
            %283 = vst.msk [vmem:[#allocation3 + $0x8] sm:$0xff] %vm279, 0.0
          $region52: #{tpu_custom_call.1} parent=47 // pred_fallthru
            _
          %v284 = vld [vmem:[%s240] sm:$0xff]
          %v285 = vld [vmem:[%s240 + $0x8] sm:$0xff]
          %v286 = vld [vmem:[%s1] sm:$0xff]
          %v287 = vld [vmem:[%s1 + $0x8] sm:$0xff]
          %vm288 = vcmask 64512
          %v290 = vsel %vm288, %v286, 0
          %v293 = vsel %vm288, %v287, 0
          %295 = vmatpush.msra.mxu0 0.0
          %296 = vmatpush.msra.mxu0 0.0
          %297 = vmatpush.msra.mxu0 0.0
          %298 = vmatpush.msra.mxu0 0.0
          %299 = vmatpush.msra.mxu0 0.0
          %300 = vmatpush.msra.mxu0 0.0
          %301 = vmatpush.msra.mxu0 0.0
          %302 = vmatpush.msra.mxu0 0.0
          %303 = vmatpush.msra.mxu0 0.0
          %304 = vmatpush.msra.mxu0 0.0
          %305 = vmatpush.msra.mxu0 0.0
          %306 = vmatpush.msra.mxu0 0.0
          %307 = vmatpush.msra.mxu0 0.0
          %308 = vmatpush.msra.mxu0 0.0
          %309 = vmatpush.msra.mxu0 0.0
          %310 = vmatpush.msra.mxu0 %v284
          %311 = vmatmul.f32.gmra.mxu0 %v290
          %v312 = vpop.f32.mrf.mxu0
          %v313 = vadd.f32 0.0, %v312
          %314 = vmatmul.f32.gmra.mxu0 %v293
          %v315 = vpop.f32.mrf.mxu0
          %v316 = vadd.f32 0.0, %v315
          %317 = vdwg.mxu0
          %318 = vmatpush.msra.mxu0 0.0
          %319 = vmatpush.msra.mxu0 0.0
          %320 = vmatpush.msra.mxu0 0.0
          %321 = vmatpush.msra.mxu0 0.0
          %322 = vmatpush.msra.mxu0 0.0
          %323 = vmatpush.msra.mxu0 0.0
          %324 = vmatpush.msra.mxu0 0.0
          %325 = vmatpush.msra.mxu0 0.0
          %326 = vmatpush.msra.mxu0 0.0
          %327 = vmatpush.msra.mxu0 0.0
          %328 = vmatpush.msra.mxu0 0.0
          %329 = vmatpush.msra.mxu0 0.0
          %330 = vmatpush.msra.mxu0 0.0
          %331 = vmatpush.msra.mxu0 0.0
          %332 = vmatpush.msra.mxu0 0.0
          %333 = vmatpush.msra.mxu0 %v285
          %334 = vmatmul.f32.gmra.mxu0 %v290
          %v335 = vpop.f32.mrf.mxu0
          %v336 = vadd.f32 0.0, %v335
          %337 = vmatmul.f32.gmra.mxu0 %v293
          %v338 = vpop.f32.mrf.mxu0
          %v339 = vadd.f32 0.0, %v338
          %340 = vdwg.mxu0
          %v341 = vld [vmem:[#allocation2] sm:$0xff]
          %v342 = vld [vmem:[#allocation2 + $0x8] sm:$0xff]
          %v343 = vadd.f32 %v313, %v336
          %344 = vadd.xlane.f32.xlu0 %v343
          %v345 = vpop.xlane.xlu0 %344
          %v346 = vadd.f32 %v316, %v339
          %347 = vadd.xlane.f32.xlu0 %v346
          %v348 = vpop.xlane.xlu0 %347
          %v349 = vadd.f32 %v341, %v345
          %v350 = vadd.f32 %v342, %v348
          %vm351 = vcmask 7168
          %352 = vst.msk [vmem:[#allocation2] sm:$0xff] %vm351, %v349
          %353 = vst.msk [vmem:[#allocation2 + $0x8] sm:$0xff] %vm351, %v350
          %v354 = vld [vmem:[#allocation3] sm:$0xff]
          %v355 = vld [vmem:[#allocation3 + $0x8] sm:$0xff]
          %v356 = vmul.f32 %v313, %v313
          %v357 = vmul.f32 %v336, %v336
          %v358 = vmul.f32 %v316, %v316
          %v359 = vmul.f32 %v339, %v339
          %v360 = vadd.f32 %v356, %v357
          %361 = vadd.xlane.f32.xlu0 %v360
          %v362 = vpop.xlane.xlu0 %361
          %v363 = vadd.f32 %v358, %v359
          %364 = vadd.xlane.f32.xlu0 %v363
          %v365 = vpop.xlane.xlu0 %364
          %v366 = vadd.f32 %v354, %v362
          %v367 = vadd.f32 %v355, %v365
          %368 = vst.msk [vmem:[#allocation3] sm:$0xff] %vm351, %v366
          %369 = vst.msk [vmem:[#allocation3 + $0x8] sm:$0xff] %vm351, %v367
          %s370 = smul.u32 %s268, 2
          %s371 = smul.addr %s370, 8
          %s372 = scalar_lea.vmem [#allocation7], %s371
          %373 = vst [vmem:[%s372] sm:$0xff] %v284
          %374 = vst [vmem:[%s372 + $0x8] sm:$0xff] %v285
        $region48: #{tpu_custom_call.1} parent=39 // pred_fallthru
          _
        %p375 = scmp.eq.s32.totalorder %s25, 1
        // Predicated region
        $region53: #{tpu_custom_call.1} parent=39 // pred_check
          %p376 = pneg %p375
        $region54: #{tpu_custom_call.1} parent=39 // pred_check_branch
          %378 = sbr.rel (%p376) target = $region56
        $region55: #{tpu_custom_call.1} parent=39 // pred_region
          %p379 = scmp.eq.s32.totalorder %s26, 0
          %p380 = scmp.eq.s32.totalorder %s27, 0
          %p381 = pnand %p379, %p380
          %p382 = pneg %p381
          // Predicated region
          $region57: #{tpu_custom_call.1} parent=55 // pred_check
            _
          $region58: #{tpu_custom_call.1} parent=55 // pred_check_branch
            %384 = sbr.rel (%p381) target = $region60
          $region59: #{tpu_custom_call.1} parent=55 // pred_region
            %v385 = vld [vmem:[#allocation2] sm:$0xff]
            %v386 = vld [vmem:[#allocation2 + $0x8] sm:$0xff]
            %v387 = vmul.f32 %v385, 0.0009765625
            %v388 = vmul.f32 %v386, 0.0009765625
            %v389 = vld [vmem:[#allocation3] sm:$0xff]
            %v390 = vld [vmem:[#allocation3 + $0x8] sm:$0xff]
            %v391 = vmul.f32 %v389, 0.0009765625
            %v392 = vmul.f32 %v390, 0.0009765625
            %v393 = vmul.f32 %v387, %v387
            %v394 = vmul.f32 %v388, %v388
            %v395 = vsub.f32 %v391, %v393
            %v396 = vsub.f32 %v392, %v394
            %v397 = vld [vmem:[%s2] sm:$0xff]
            %v398 = vld [vmem:[%s2 + $0x8] sm:$0xff]
            %v399 = vadd.f32 %v395, 1e-05
            %v400 = vadd.f32 %v396, 1e-05
            %v401 = vrsqrt.pop %v399
            %v402 = vmul.f32 %v401, %v399
            %v403 = vmul.f32 %v402, %v401
            %v404 = vmul.f32 0.5, %v403
            %v405 = vsub.f32 1.5, %v404
            %v406 = vmul.f32 %v401, %v405
            %vm407 = vweird.f32 %v399
            %vm408 = vweird.f32 %v401
            %vm409 = vmor %vm407, %vm408
            %v410 = vsel %vm409, %v401, %v406
            %v411 = vrsqrt.pop %v400
            %v412 = vmul.f32 %v411, %v400
            %v413 = vmul.f32 %v412, %v411
            %v414 = vmul.f32 0.5, %v413
            %v415 = vsub.f32 1.5, %v414
            %v416 = vmul.f32 %v411, %v415
            %vm417 = vweird.f32 %v400
            %vm418 = vweird.f32 %v411
            %vm419 = vmor %vm417, %vm418
            %v420 = vsel %vm419, %v411, %v416
            %v421 = vmul.f32 %v397, %v410
            %v422 = vmul.f32 %v398, %v420
            %v423 = vld [vmem:[%s1] sm:$0xff]
            %v424 = vld [vmem:[%s1 + $0x8] sm:$0xff]
            %426 = vset.pattern.permute.xlu0 0
            %427 = vperm.xlu0 %426, %v421
            %v428 = vpop.permute.xlu0 %427
            %431 = vset.pattern.permute.xlu0 0
            %432 = vperm.xlu0 %431, %v422
            %v433 = vpop.permute.xlu0 %432
            %v435 = vmul.f32 %v423, %v428
            %v436 = vmul.f32 %v424, %v433
            %vm437 = vcmask 64512
            %438 = vst.msk [vmem:[#allocation4] sm:$0xff] %vm437, %v435
            %439 = vst.msk [vmem:[#allocation4 + $0x8] sm:$0xff] %vm437, %v436
            %v440 = vld [vmem:[%s3] sm:$0xff]
            %v441 = vld [vmem:[%s3 + $0x8] sm:$0xff]
            %v442 = vmul.f32 %v387, %v421
            %v443 = vmul.f32 %v388, %v422
            %v444 = vsub.f32 %v440, %v442
            %v445 = vsub.f32 %v441, %v443
            %vm446 = vcmask 7168
            %447 = vst.msk [vmem:[#allocation5] sm:$0xff] %vm446, %v444
            %448 = vst.msk [vmem:[#allocation5 + $0x8] sm:$0xff] %vm446, %v445
            %vm449 = vcmask 15360
            %450 = vst.msk [vmem:[#allocation6] sm:$0xff] %vm449, 0.0
            %451 = vst.msk [vmem:[#allocation6 + $0x8] sm:$0xff] %vm449, 0.0
          $region60: #{tpu_custom_call.1} parent=55 // pred_fallthru
            _
          %s452 = smul.u32 %s268, 2
          %s453 = smul.addr %s452, 8
          %s454 = scalar_lea.vmem [#allocation7], %s453
          %v455 = vld [vmem:[%s454] sm:$0xff]
          %v456 = vld [vmem:[%s454 + $0x8] sm:$0xff]
          %v457 = vld [vmem:[#allocation4] sm:$0xff]
          %v458 = vld [vmem:[#allocation4 + $0x8] sm:$0xff]
          %v459 = vld [vmem:[#allocation5] sm:$0xff]
          %v460 = vld [vmem:[#allocation5 + $0x8] sm:$0xff]
          %462 = vset.pattern.permute.xlu0 0
          %463 = vperm.xlu0 %462, %v459
          %v464 = vpop.permute.xlu0 %463
          %467 = vset.pattern.permute.xlu0 0
          %468 = vperm.xlu0 %467, %v460
          %v469 = vpop.permute.xlu0 %468
          %vm471 = vcmask 64512
          %v473 = vsel %vm471, %v457, 0
          %v476 = vsel %vm471, %v458, 0
          %478 = vmatpush.msra.mxu0 0.0
          %479 = vmatpush.msra.mxu0 0.0
          %480 = vmatpush.msra.mxu0 0.0
          %481 = vmatpush.msra.mxu0 0.0
          %482 = vmatpush.msra.mxu0 0.0
          %483 = vmatpush.msra.mxu0 0.0
          %484 = vmatpush.msra.mxu0 0.0
          %485 = vmatpush.msra.mxu0 0.0
          %486 = vmatpush.msra.mxu0 0.0
          %487 = vmatpush.msra.mxu0 0.0
          %488 = vmatpush.msra.mxu0 0.0
          %489 = vmatpush.msra.mxu0 0.0
          %490 = vmatpush.msra.mxu0 0.0
          %491 = vmatpush.msra.mxu0 0.0
          %492 = vmatpush.msra.mxu0 0.0
          %493 = vmatpush.msra.mxu0 %v455
          %494 = vmatmul.f32.gmra.mxu0 %v473
          %v495 = vpop.f32.mrf.mxu0
          %v496 = vadd.f32 %v464, %v495
          %497 = vmatmul.f32.gmra.mxu0 %v476
          %v498 = vpop.f32.mrf.mxu0
          %v499 = vadd.f32 %v469, %v498
          %500 = vdwg.mxu0
          %501 = vmatpush.msra.mxu0 0.0
          %502 = vmatpush.msra.mxu0 0.0
          %503 = vmatpush.msra.mxu0 0.0
          %504 = vmatpush.msra.mxu0 0.0
          %505 = vmatpush.msra.mxu0 0.0
          %506 = vmatpush.msra.mxu0 0.0
          %507 = vmatpush.msra.mxu0 0.0
          %508 = vmatpush.msra.mxu0 0.0
          %509 = vmatpush.msra.mxu0 0.0
          %510 = vmatpush.msra.mxu0 0.0
          %511 = vmatpush.msra.mxu0 0.0
          %512 = vmatpush.msra.mxu0 0.0
          %513 = vmatpush.msra.mxu0 0.0
          %514 = vmatpush.msra.mxu0 0.0
          %515 = vmatpush.msra.mxu0 0.0
          %516 = vmatpush.msra.mxu0 %v456
          %517 = vmatmul.f32.gmra.mxu0 %v473
          %v518 = vpop.f32.mrf.mxu0
          %v519 = vadd.f32 %v464, %v518
          %520 = vmatmul.f32.gmra.mxu0 %v476
          %v521 = vpop.f32.mrf.mxu0
          %v522 = vadd.f32 %v469, %v521
          %523 = vdwg.mxu0
          %v524 = vmul.f32 %v496, 0.2
          %v525 = vmul.f32 %v519, 0.2
          %v526 = vmul.f32 %v499, 0.2
          %v527 = vmul.f32 %v522, 0.2
          %v528 = vmax.f32 %v496, %v524
          %v529 = vmax.f32 %v519, %v525
          %v530 = vmax.f32 %v499, %v526
          %v531 = vmax.f32 %v522, %v527
          %v532 = vadd.f32 %v528, %v529
          %533 = vadd.xlane.f32.xlu0 %v532
          %v534 = vpop.xlane.xlu0 %533
          %v535 = vadd.f32 %v530, %v531
          %536 = vadd.xlane.f32.xlu0 %v535
          %v537 = vpop.xlane.xlu0 %536
          %v538 = vlaneseq
          %v539 = vand.u32 %v538, 127
          %v540 = vstv %s26
          %vm541 = vcmp.eq.s32.totalorder %v539, %v540
          %v542 = vsel %vm541, 1, 0
          %v543 = vcvt.s32.f32 %v542
          %v544 = vld [vmem:[#allocation6] sm:$0xff]
          %v545 = vld [vmem:[#allocation6 + $0x8] sm:$0xff]
          %v546 = vmul.f32 %v534, %v543
          %v547 = vmul.f32 %v537, %v543
          %v548 = vadd.f32 %v544, %v546
          %v549 = vadd.f32 %v545, %v547
          %vm550 = vcmask 15360
          %551 = vst.msk [vmem:[#allocation6] sm:$0xff] %vm550, %v548
          %552 = vst.msk [vmem:[#allocation6 + $0x8] sm:$0xff] %vm550, %v549
          %p553 = scmp.eq.s32.totalorder %s26, 1
          %p554 = scmp.eq.s32.totalorder %s27, 1
          %p555 = pnand %p553, %p554
          %p556 = pneg %p555
          // Predicated region
          $region61: #{tpu_custom_call.1} parent=55 // pred_check
            _
          $region62: #{tpu_custom_call.1} parent=55 // pred_check_branch
            %558 = sbr.rel (%p555) target = $region64
          $region63: #{tpu_custom_call.1} parent=55 // pred_region
            %v559 = vld [vmem:[#allocation6] sm:$0xff]
            %v560 = vld [vmem:[#allocation6 + $0x8] sm:$0xff]
            %v561 = vmul.f32 %v559, 0.001953125
            %v562 = vmul.f32 %v560, 0.001953125
            %v563 = vld [vmem:[%s4] sm:$0xff]
            %v564 = vld [vmem:[%s4 + $0x8] sm:$0xff]
            %566 = vset.pattern.permute.xlu0 0
            %567 = vperm.xlu0 %566, %v561
            %v568 = vpop.permute.xlu0 %567
            %571 = vset.pattern.permute.xlu0 0
            %572 = vperm.xlu0 %571, %v562
            %v573 = vpop.permute.xlu0 %572
            %v575 = vmul.f32 %v568, %v563
            %v576 = vmul.f32 %v573, %v564
            %v577 = vadd.f32 %v575, %v576
            %v578 = vrot.slane %v577, 4
            %v579 = vadd.f32 %v577, %v578
            %v580 = vrot.slane %v579, 2
            %v581 = vadd.f32 %v579, %v580
            %v582 = vrot.slane %v581, 1
            %v583 = vadd.f32 %v581, %v582
            %v584 = vxor.u32 %v583, 2147483648
            %v585 = vmul.f32 %v584, 1.442695
            %v586 = vpow.pop %v585
            %v587 = vadd.f32 %v586, 1.0
            %v588 = vrcp.pop %v587
            %v589 = vmul.f32 %v587, %v588
            %v590 = vsub.f32 1.0, %v589
            %v591 = vmul.f32 %v588, %v590
            %v592 = vadd.f32 %v588, %v591
            %vm593 = vweird.f32 %v587
            %vm594 = vweird.f32 %v588
            %vm595 = vmor %vm593, %vm594
            %v596 = vsel %vm595, %v588, %v592
            %v597 = vand.u32 2147483647, %v587
            %vm598 = vcmp.eq.f32.partialorder %v597, 8.507059e+37
            %v599 = vand.u32 %v587, 2147483648
            %v600 = vor.u32 1.1754944e-38, %v599
            %v601 = vsel %vm598, %v600, %v596
            %v602 = vmul.f32 1.0, %v601
            %603 = vst [vmem:[#allocation11] sm:$0x1] %v602
            %s604 = scalar_lea.vmem %s4, 16
            %v605 = vld [vmem:[%s604] sm:$0xff]
            %v606 = vld [vmem:[%s604 + $0x8] sm:$0xff]
            %607 = vset.pattern.permute.xlu0 1
            %608 = vperm.xlu0 %607, %v561
            %v609 = vpop.permute.xlu0 %608
            %611 = vset.pattern.permute.xlu0 1
            %612 = vperm.xlu0 %611, %v562
            %v613 = vpop.permute.xlu0 %612
            %v615 = vmul.f32 %v609, %v605
            %v616 = vmul.f32 %v613, %v606
            %v617 = vadd.f32 %v615, %v616
            %v618 = vrot.slane %v617, 4
            %v619 = vadd.f32 %v617, %v618
            %v620 = vrot.slane %v619, 2
            %v621 = vadd.f32 %v619, %v620
            %v622 = vrot.slane %v621, 1
            %v623 = vadd.f32 %v621, %v622
            %v624 = vxor.u32 %v623, 2147483648
            %v625 = vmul.f32 %v624, 1.442695
            %v626 = vpow.pop %v625
            %v627 = vadd.f32 %v626, 1.0
            %v628 = vrcp.pop %v627
            %v629 = vmul.f32 %v627, %v628
            %v630 = vsub.f32 1.0, %v629
            %v631 = vmul.f32 %v628, %v630
            %v632 = vadd.f32 %v628, %v631
            %vm633 = vweird.f32 %v627
            %vm634 = vweird.f32 %v628
            %vm635 = vmor %vm633, %vm634
            %v636 = vsel %vm635, %v628, %v632
            %v637 = vand.u32 2147483647, %v627
            %vm638 = vcmp.eq.f32.partialorder %v637, 8.507059e+37
            %v639 = vand.u32 %v627, 2147483648
            %v640 = vor.u32 1.1754944e-38, %v639
            %v641 = vsel %vm638, %v640, %v636
            %v642 = vmul.f32 1.0, %v641
            %643 = vst [vmem:[#allocation11 + $0x1] sm:$0x1] %v642
          $region64: #{tpu_custom_call.1} parent=55 // pred_fallthru
            _
        $region56: #{tpu_custom_call.1} parent=39 // pred_fallthru
          _
        // Predicated region
        $region65: #{tpu_custom_call.1} parent=39 // pred_check
          %p644 = pneg %p170
        $region66: #{tpu_custom_call.1} parent=39 // pred_check_branch
          %646 = sbr.rel (%p644) target = $region68
        $region67: #{tpu_custom_call.1} parent=39 // pred_region
          %648 = vsyncadd [#allocation10], 0
          %s650 = sshll.u32 [#allocation11], 4
          %s651 = int_to_ptr.vmem [resolvable:$true] %s650
          %s652 = sshll.u32 %s5, 4
          %s653 = int_to_ptr.hbm [resolvable:$true] %s652
          %655 = dma.vmem_to_hbm [thread:$0]  %s651, 32, %s653, [#allocation10]
        $region68: #{tpu_custom_call.1} parent=39 // pred_fallthru
          _
        // Predicated region
        $region69: #{tpu_custom_call.1} parent=39 // pred_check
          %p656 = pneg %p170
        $region70: #{tpu_custom_call.1} parent=39 // pred_check_branch
          %658 = sbr.rel (%p656) target = $region72
        $region71: #{tpu_custom_call.1} parent=39 // pred_region
          %660 = dma.done [#allocation10], 32
        $region72: #{tpu_custom_call.1} parent=39 // pred_fallthru
          _
      $region40: #{tpu_custom_call.1} parent=5 // pred_fallthru
        _
      %p661 = scmp.le.s32.totalorder 2, %s15
      // Predicated region
      $region73: #{tpu_custom_call.1} parent=5 // pred_check
        %p662 = pneg %p661
      $region74: #{tpu_custom_call.1} parent=5 // pred_check_branch
        %664 = sbr.rel (%p662) target = $region76
      $region75: #{tpu_custom_call.1} parent=5 // pred_region
        %s665 = ssub.s32 %s15, 2
      $region76: #{tpu_custom_call.1} parent=5 // pred_fallthru
        _
    $region6: #{tpu_custom_call.1} parent=1 // loop_footer
      %s19 = sadd.s32 1, %s15
    $region7: #{tpu_custom_call.1} parent=1 // loop_footer_branch
      %14 = sbr.rel target = $region3
    $region8: #{tpu_custom_call.1} parent=1 // loop_exit
      _
    %666 = vsyncpa [#allocation9], 1
    %s667 = scalar_lea.sflag [#allocation9], 1
    %668 = vsyncpa %s667, 1
    %669 = vsyncpa [#allocation10], 1
    %s670 = scalar_lea.sflag [#allocation10], 1
    %671 = vsyncpa %s670, 1

</llo_original>
